<compile_context>
chip_gen: v5e
topology: v5e:2x2
jax: 0.10.0
libtpu: 0.0.40
codegen_flags: <defaults>
</compile_context>

<pallas_src>
import jax
import jax.numpy as jnp
from jax.experimental import pallas as pl
from jax.experimental.pallas import tpu as pltpu


_LANE = 128
_SUBLANE = 8


def _round_up(x, m):
    return ((x + m - 1) // m) * m


# ----------------------------------------------------------------------------
# Pallas kernel:  o[r, :] = where(mask[r], x[r, :] @ W, 0) + bias
#   (mathematically identical to masked_fill(x)=0 followed by Linear)
# ----------------------------------------------------------------------------
def _masked_gemm_kernel(x_ref, m_ref, w_ref, b_ref, o_ref):
    # x_ref : (tm, D)   f32   flattened activation tile (bf16 cast in-kernel)
    # m_ref : (tm, 1)   f32   per-row keep mask (1.0 keep / 0.0 fill)
    # w_ref : (D, Hp)   bf16  Linear weight (transposed, zero-padded to 128)
    # b_ref : (1, Hp)   f32   Linear bias (zero-padded)
    # o_ref : (tm, Hp)  f32   lane-dense output tile
    x = x_ref[...].astype(jnp.bfloat16)                 # free VPU cast
    xw = jnp.dot(x, w_ref[...], preferred_element_type=jnp.float32)
    keep = m_ref[...] > 0.0                             # (tm, 1) -> lane bcast
    o_ref[...] = jnp.where(keep, xw, 0.0) + b_ref[...]


def _kernel_vmem_bytes(tm, D, Hp):
    """Double-buffered VMEM footprint of one grid step (bytes)."""
    d_l = _round_up(D, _LANE)
    h_l = _round_up(Hp, _LANE)
    x_b = 2 * tm * d_l * 4                         # f32 activation tile
    m_b = 2 * tm * _LANE * 4                       # (tm,1) f32 mask, lane-padded
    w_b = 2 * _round_up(D, _SUBLANE) * h_l * 2     # bf16 resident weight
    b_b = 2 * _SUBLANE * h_l * 4                   # f32 resident bias
    o_b = 2 * tm * h_l * 4                         # f32 output tile
    return x_b + m_b + w_b + b_b + o_b


def sentence_transform_pallas(sentence, sentence_mask, weight_dhp, bias_hp,
                              *, hidden_size, tm_target=512):
    """sentence: (B, L, D) f32; sentence_mask: (B, L) bool;
       weight_dhp: (D, Hp) bf16 (pre-padded); bias_hp: (1, Hp) f32 (pre-padded)
       -> (B, L, hidden_size) f32."""
    B, L, D = sentence.shape
    Hp = weight_dhp.shape[1]
    H = hidden_size
    M = B * L

    # Big M tiles amortize the ~0.35us per-grid-step overhead; keep (8,.)-aligned
    # and keep >= 2 grid steps so v7x's two TensorCores both get work.
    tm = min(tm_target, _round_up(M, _SUBLANE))
    tm = max(_SUBLANE, min(tm, _round_up(pl.cdiv(M, 2), _SUBLANE)))
    grid_m = pl.cdiv(M, tm)                        # partial last block is clipped

    # No wrapper-side activation copy: reshape is a no-copy dim collapse, the
    # bf16 cast happens inside the kernel.  Only the tiny (M,1) mask is built.
    x2 = sentence.reshape(M, D)
    m2 = sentence_mask.reshape(M, 1).astype(jnp.float32)

    # Real footprint + headroom; above v5e's 16 MiB scoped default, well below
    # v7x's 64 MiB physical VMEM.
    footprint = _kernel_vmem_bytes(tm, D, Hp)
    vmem_limit = int(min(max(footprint + footprint // 2 + (2 << 20), 16 << 20),
                         40 << 20))

    out = pl.pallas_call(
        _masked_gemm_kernel,
        out_shape=jax.ShapeDtypeStruct((M, Hp), jnp.float32),
        grid=(grid_m,),
        in_specs=[
            pl.BlockSpec((tm, D), lambda i: (i, 0)),
            pl.BlockSpec((tm, 1), lambda i: (i, 0)),
            # Grid-invariant weight / bias (constant block index -> resident).
            # TODO(synk): pin these to a single buffer (pipeline_mode=pl.Buffered(1))
            # once exercised; the double-buffered copy is already accounted for
            # in the footprint above.
            pl.BlockSpec((D, Hp), lambda i: (0, 0)),
            pl.BlockSpec((1, Hp), lambda i: (0, 0)),
        ],
        out_specs=pl.BlockSpec((tm, Hp), lambda i: (i, 0)),
        compiler_params=pltpu.CompilerParams(
            dimension_semantics=("parallel",),
            vmem_limit_bytes=vmem_limit,
        ),
    )(x2, m2, weight_dhp, bias_hp)

    if Hp != H:              # only when hidden_size isn't 128-aligned (test cfg)
        out = out[:, :H]
    return out.reshape(B, L, H)


# ----------------------------------------------------------------------------
# Module wrapper (mirrors XlnetEncodingNetwork.forward)
# ----------------------------------------------------------------------------
def make_params(key, vocab_size, n_segments, xlnet_size, hidden_size):
    k1, k2, k3, k4 = jax.random.split(key, 4)
    Hp = _round_up(hidden_size, _LANE)
    # TODO(synk): the full XLNet transformer (external submodule) has no
    # single-kernel Pallas equivalent; stubbed as token+segment embeddings.
    tok_emb = jax.random.normal(k1, (vocab_size, xlnet_size), jnp.float32) * 0.02
    seg_emb = jax.random.normal(k2, (n_segments, xlnet_size), jnp.float32) * 0.02
    # nn.Linear(xlnet_size, hidden_size): stored as (D, H) = weight.T
    lin_w = (jax.random.normal(k3, (xlnet_size, hidden_size), jnp.float32)
             / jnp.sqrt(jnp.float32(xlnet_size)))
    lin_b = jax.random.normal(k4, (hidden_size,), jnp.float32) * 0.01
    return {
        "tok_emb": tok_emb,
        "seg_emb": seg_emb,
        # f32 copies for the pure-JAX reference
        "lin_w_f32": lin_w,
        "lin_b_f32": lin_b,
        # Hoisted (done once, not per forward): lane-pad H to 128 and cast the
        # weight to bf16 for the MXU.
        "lin_w": jnp.pad(lin_w.astype(jnp.bfloat16),
                         ((0, 0), (0, Hp - hidden_size))),
        "lin_b": jnp.pad(lin_b, (0, Hp - hidden_size)).reshape(1, Hp),
        "hidden_size": hidden_size,
    }


def xlnet_encoding_forward(params, xlnet_token, xlnet_segment):
    """Eager wrapper.  The kernel runs at the static (B, S) shape; only the
    final output slice uses the data-dependent max_len (PyTorch `.item()`)."""
    # --- encoder_layer = self.xlnet(...)[0]  (stubbed, plain-JAX glue) -------
    encoder_layer = (params["tok_emb"][xlnet_token]
                     + params["seg_emb"][xlnet_segment])          # (B, S, D)

    batch_size, segment_len = xlnet_segment.shape
    max_segment_len = jnp.argmax(xlnet_segment, axis=-1)[:, None]            # (B, 1)
    batch_arrange = jnp.broadcast_to(
        jnp.arange(segment_len)[None, :], (batch_size, segment_len))         # (B, S)
    segment_mask = batch_arrange <= max_segment_len
    sentence_mask = segment_mask & (xlnet_segment == 0)                      # (B, S)
    sentence_lens = sentence_mask.astype(jnp.int32).sum(axis=1, keepdims=True)

    # Launch the masked-GEMM kernel first (async dispatch) ...
    out_full = sentence_transform_pallas(
        encoder_layer, sentence_mask, params["lin_w"], params["lin_b"],
        hidden_size=params["hidden_size"])                                   # (B, S, H)
    # ... then do the host round-trip for max_len so the D2H sync overlaps
    # with the GEMM instead of serializing before it.
    max_len = int(jax.device_get(sentence_lens.max()))                       # .item()
    return out_full[:, :max_len]                                             # (B, max_len, H)


# ----------------------------------------------------------------------------
# Pure-JAX f32 reference (mirrors the PyTorch module exactly)
# ----------------------------------------------------------------------------
def reference_forward(params, xlnet_token, xlnet_segment):
    encoder_layer = (params["tok_emb"][xlnet_token]
                     + params["seg_emb"][xlnet_segment])
    batch_size, segment_len = xlnet_segment.shape
    max_segment_len = jnp.argmax(xlnet_segment, axis=-1)[:, None]
    batch_arrange = jnp.broadcast_to(
        jnp.arange(segment_len)[None, :], (batch_size, segment_len))
    segment_mask = batch_arrange <= max_segment_len
    sentence_mask = segment_mask & (xlnet_segment == 0)
    sentence_lens = sentence_mask.astype(jnp.int32).sum(axis=1, keepdims=True)
    max_len = int(jax.device_get(sentence_lens.max()))
    sentence = encoder_layer[:, 0:max_len]
    sm = sentence_mask[:, 0:max_len]
    sentence = jnp.where(sm[..., None], sentence, 0.0)
    return sentence @ params["lin_w_f32"] + params["lin_b_f32"]


if __name__ == "__main__":
    key = jax.random.PRNGKey(0)
    B, S = 2, 16
    vocab_size, n_segments = 100, 2
    xlnet_size, hidden_size = 64, 32

    kp, kt = jax.random.split(key)
    params = make_params(kp, vocab_size, n_segments, xlnet_size, hidden_size)

    xlnet_token = jax.random.randint(kt, (B, S), 0, vocab_size, dtype=jnp.int32)
    # segment ids: zeros for the sentence part, then ones (aspect-term setup)
    seg0 = jnp.concatenate([jnp.zeros((6,), jnp.int32), jnp.ones((S - 6,), jnp.int32)])
    seg1 = jnp.concatenate([jnp.zeros((9,), jnp.int32), jnp.ones((S - 9,), jnp.int32)])
    xlnet_segment = jnp.stack([seg0, seg1], axis=0)                          # (B, S)

    out = xlnet_encoding_forward(params, xlnet_token, xlnet_segment)
    out = jax.block_until_ready(out)

    ref = reference_forward(params, xlnet_token, xlnet_segment)
    assert out.shape == ref.shape, (out.shape, ref.shape)
    # bf16 matmul operands (f32 accumulation) vs pure-f32 reference.
    assert jnp.allclose(out, ref, atol=2e-2, rtol=2e-2), "mismatch vs reference"

    print("KERNEL_OK")
</pallas_src>

<mosaic_0001>
module attributes {stable_mosaic.version = 11 : i64} {
  func.func @_masked_gemm_kernel(%arg0: i32, %arg1: memref<16x64xf32, #tpu.memory_space<vmem>>, %arg2: memref<16x1xf32, #tpu.memory_space<vmem>>, %arg3: memref<64x128xbf16, #tpu.memory_space<vmem>>, %arg4: memref<1x128xf32, #tpu.memory_space<vmem>>, %arg5: memref<16x128xf32, #tpu.memory_space<vmem>>) attributes {dimension_semantics = [#tpu.dimension_semantics<parallel>], iteration_bounds = array<i64: 2>, scalar_prefetch = 0 : i64, scratch_operands = 0 : i64, tpu.core_type = #tpu.core_type<tc>, window_params = [{transform_indices = @transform_0, window_bounds = array<i64: 16, 64>}, {transform_indices = @transform_1, window_bounds = array<i64: 16, 1>}, {pipeline_mode = #tpu.pipeline_mode<synchronous>, transform_indices = @transform_2, window_bounds = array<i64: 64, 128>}, {pipeline_mode = #tpu.pipeline_mode<synchronous>, transform_indices = @transform_3, window_bounds = array<i64: 1, 128>}, {transform_indices = @transform_4, window_bounds = array<i64: 16, 128>}]} {
    %c0 = arith.constant 0 : index
    %c0_0 = arith.constant 0 : index
    %0 = vector.load %arg1[%c0, %c0_0] : memref<16x64xf32, #tpu.memory_space<vmem>>, vector<16x64xf32>
    %1 = arith.truncf %0 : vector<16x64xf32> to vector<16x64xbf16>
    %c0_1 = arith.constant 0 : index
    %c0_2 = arith.constant 0 : index
    %2 = vector.load %arg3[%c0_1, %c0_2] : memref<64x128xbf16, #tpu.memory_space<vmem>>, vector<64x128xbf16>
    %cst = arith.constant dense<0.000000e+00> : vector<16x128xf32>
    %3 = tpu.matmul %1, %2, %cst {dimension_numbers = #tpu.dot_dimension_numbers<[1], [0], [0], [1], [0, 0, 1, 1], [], []>} : vector<16x64xbf16>, vector<64x128xbf16>, vector<16x128xf32> -> vector<16x128xf32>
    %c0_3 = arith.constant 0 : index
    %c0_4 = arith.constant 0 : index
    %4 = vector.load %arg2[%c0_3, %c0_4] : memref<16x1xf32, #tpu.memory_space<vmem>>, vector<16x1xf32>
    %cst_5 = arith.constant 0.000000e+00 : f32
    %5 = vector.broadcast %cst_5 : f32 to vector<16x1xf32>
    %6 = arith.cmpf ogt, %4, %5 : vector<16x1xf32>
    %cst_6 = arith.constant 0.000000e+00 : f32
    %7 = vector.shape_cast %6 : vector<16x1xi1> to vector<16x1xi1>
    %8 = vector.broadcast %7 : vector<16x1xi1> to vector<16x128xi1>
    %9 = vector.broadcast %cst_6 : f32 to vector<16x128xf32>
    %10 = arith.select %8, %3, %9 : vector<16x128xi1>, vector<16x128xf32>
    %c0_7 = arith.constant 0 : index
    %c0_8 = arith.constant 0 : index
    %11 = vector.load %arg4[%c0_7, %c0_8] : memref<1x128xf32, #tpu.memory_space<vmem>>, vector<1x128xf32>
    %12 = vector.broadcast %11 : vector<1x128xf32> to vector<16x128xf32>
    %13 = arith.addf %10, %12 : vector<16x128xf32>
    %c0_9 = arith.constant 0 : index
    %c0_10 = arith.constant 0 : index
    %14 = vector.load %arg5[%c0_9, %c0_10] : memref<16x128xf32, #tpu.memory_space<vmem>>, vector<16x128xf32>
    tpu.vector_store %arg5[%c0_9, %c0_10], %13 {strides = array<i32>} : memref<16x128xf32, #tpu.memory_space<vmem>>, vector<16x128xf32>,
    return
  }
  func.func @transform_0(%arg0: i32) -> (i32, i32) {
    %c0_i32 = arith.constant 0 : i32
    %c0_i32_0 = arith.constant 0 : i32
    return %arg0, %c0_i32 : i32, i32
  }
  func.func @transform_1(%arg0: i32) -> (i32, i32) {
    %c0_i32 = arith.constant 0 : i32
    %c0_i32_0 = arith.constant 0 : i32
    return %arg0, %c0_i32 : i32, i32
  }
  func.func @transform_2(%arg0: i32) -> (i32, i32) {
    %c0_i32 = arith.constant 0 : i32
    %c0_i32_0 = arith.constant 0 : i32
    %c0_i32_1 = arith.constant 0 : i32
    return %c0_i32, %c0_i32_0 : i32, i32
  }
  func.func @transform_3(%arg0: i32) -> (i32, i32) {
    %c0_i32 = arith.constant 0 : i32
    %c0_i32_0 = arith.constant 0 : i32
    %c0_i32_1 = arith.constant 0 : i32
    return %c0_i32, %c0_i32_0 : i32, i32
  }
  func.func @transform_4(%arg0: i32) -> (i32, i32) {
    %c0_i32 = arith.constant 0 : i32
    %c0_i32_0 = arith.constant 0 : i32
    return %arg0, %c0_i32 : i32, i32
  }
}

</mosaic_0001>

<llo_original>
// kernel: tpu_custom_call.1
$region0: #{tpu_custom_call.1}
  #allocation0 [shape = 'u32[]', space=smem, size = 0x4, offset = 0x4, fixed_abs, tag = 'smem constant byte address 0x4 - core index']
  #allocation1 [shape = 'u32[72,128]{1,0:T(1,128)}', space=vmem, size = 0x9000, scoped, tag = 'internal scratch']
  %s0 = inlined_call_operand.vmem [shape: f32[32,64], index: 0, kind: input, shape index: {}]
  %s1 = inlined_call_operand.vmem [shape: f32[32,1], index: 1, kind: input, shape index: {}]
  %s2 = inlined_call_operand.hbm [shape: bf16[64,128], index: 2, kind: input, shape index: {}]
  %s3 = inlined_call_operand.vmem [shape: f32[1,128], index: 3, kind: input, shape index: {}]
  %s4 = inlined_call_operand.hbm [shape: f32[32,128], index: 4, kind: output, shape index: {}]
  %s5 = sld [smem:[#allocation0]]
  $region53: #{tpu_custom_call.1} parent=0
    _
  %s7 = ssub.s32 1, %s5
  %s8 = scalar_select 0, %s7, %s5
  $region1: #{tpu_custom_call.1} parent=0
    #allocation2 [shape = 'u8[16384]{0}', space=vmem, size = 0x4000, scoped, tag = 'input window, operand 2, single buffered']
    #allocation3 [shape = 's32[2]{0}', space=sflag, size = 0x8, scoped, tag = 'scoped memory for tpu_custom_call.1']
    #allocation4 [shape = 's32[2]{0}', space=sflag, size = 0x8, scoped, tag = 'scoped memory for tpu_custom_call.1']
    #allocation5 [shape = 'u8[16384]{0}', space=vmem, size = 0x4000, scoped, tag = 'output window, operand 0']
    %9 = vsyncpa [#allocation3], 0
    %10 = vsyncpa [#allocation4], 0
    %s11 = scalar_lea.sflag [#allocation4], 1
    %12 = vsyncpa %s11, 0
    loop: start=0, step=1, limit=4
    $region2: #{tpu_custom_call.1} parent=1 // loop_pre_header
      _
    $region3: #{tpu_custom_call.1} parent=1 // loop_header
      %s14 = sphi 0, %s18
      %p15 = scmp.ge.s32.totalorder %s14, 4
      %s24 = sphi 0, %s26
      %s27 = sphi 0, %s24
      %s28 = sphi 0, %s27
      %s44 = sphi 0, %s28
      %s50 = sphi 0, %s52
      %s53 = sphi 0, %s50
      %s54 = sphi 0, %s53
      %s70 = sphi 0, %s54
      %s74 = sphi 0, %s74
      %s76 = sphi 0, %s74
      %s77 = sphi 0, %s76
      %s91 = sphi 0, %s77
      %s95 = sphi 0, %s95
      %s97 = sphi 0, %s95
      %s98 = sphi 0, %s97
      %s112 = sphi 0, %s98
      %s118 = sphi 0, %s120
      %s121 = sphi 0, %s118
      %s122 = sphi 0, %s121
      %s138 = sphi 0, %s122
    $region4: #{tpu_custom_call.1} parent=1 // loop_header_branch
      %17 = sbr.rel (%p15) target = $region8
    $region5: #{tpu_custom_call.1} parent=1 // loop_body
      %s19 = ssub.s32 %s14, 1
      %s20 = ssub.s32 %s14, 2
      %s21 = sadd.s32 %s14, 1
      %s22 = ssub.s32 %s14, %s21
      %p23 = scmp.eq.s32.totalorder %s22, 0
      %s25 = sadd.s32 %s24, 1
      %s26 = scalar_select %p23, %s24, %s25
      %p29 = pneg %p23
      %p30 = scmp.eq.s32.totalorder %s14, 1
      %p31 = por %p29, %p30
      %p32 = scmp.ne.s32.totalorder %s24, %s27
      %p33 = scmp.eq.s32.totalorder %s14, 0
      %p34 = por %p32, %p33
      %p35 = scmp.ne.s32.totalorder %s24, %s27
      %p36 = scmp.eq.s32.totalorder %s19, 1
      %p37 = por %p35, %p36
      %p38 = scmp.ne.s32.totalorder %s27, %s28
      %p39 = scmp.eq.s32.totalorder %s19, 0
      %p40 = por %p38, %p39
      %p41 = scmp.ne.s32.totalorder %s27, %s28
      %p42 = scmp.eq.s32.totalorder %s20, 1
      %p43 = por %p41, %p42
      %p45 = scmp.ne.s32.totalorder %s28, %s44
      %p46 = scmp.eq.s32.totalorder %s20, 0
      %p47 = por %p45, %p46
      %s48 = ssub.s32 %s14, %s21
      %p49 = scmp.eq.s32.totalorder %s48, 0
      %s51 = sadd.s32 %s50, 1
      %s52 = scalar_select %p49, %s50, %s51
      %p55 = pneg %p49
      %p56 = scmp.eq.s32.totalorder %s14, 1
      %p57 = por %p55, %p56
      %p58 = scmp.ne.s32.totalorder %s50, %s53
      %p59 = scmp.eq.s32.totalorder %s14, 0
      %p60 = por %p58, %p59
      %p61 = scmp.ne.s32.totalorder %s50, %s53
      %p62 = scmp.eq.s32.totalorder %s19, 1
      %p63 = por %p61, %p62
      %p64 = scmp.ne.s32.totalorder %s53, %s54
      %p65 = scmp.eq.s32.totalorder %s19, 0
      %p66 = por %p64, %p65
      %p67 = scmp.ne.s32.totalorder %s53, %s54
      %p68 = scmp.eq.s32.totalorder %s20, 1
      %p69 = por %p67, %p68
      %p71 = scmp.ne.s32.totalorder %s54, %s70
      %p72 = scmp.eq.s32.totalorder %s20, 0
      %p73 = por %p71, %p72
      %s75 = sadd.s32 %s74, 1
      %p78 = scmp.eq.s32.totalorder %s14, 1
      %p79 = scmp.ne.s32.totalorder %s74, %s76
      %p80 = scmp.eq.s32.totalorder %s14, 0
      %p81 = por %p79, %p80
      %p82 = scmp.ne.s32.totalorder %s74, %s76
      %p83 = scmp.eq.s32.totalorder %s19, 1
      %p84 = por %p82, %p83
      %p85 = scmp.ne.s32.totalorder %s76, %s77
      %p86 = scmp.eq.s32.totalorder %s19, 0
      %p87 = por %p85, %p86
      %p88 = scmp.ne.s32.totalorder %s76, %s77
      %p89 = scmp.eq.s32.totalorder %s20, 1
      %p90 = por %p88, %p89
      %p92 = scmp.ne.s32.totalorder %s77, %s91
      %p93 = scmp.eq.s32.totalorder %s20, 0
      %p94 = por %p92, %p93
      %s96 = sadd.s32 %s95, 1
      %p99 = scmp.eq.s32.totalorder %s14, 1
      %p100 = scmp.ne.s32.totalorder %s95, %s97
      %p101 = scmp.eq.s32.totalorder %s14, 0
      %p102 = por %p100, %p101
      %p103 = scmp.ne.s32.totalorder %s95, %s97
      %p104 = scmp.eq.s32.totalorder %s19, 1
      %p105 = por %p103, %p104
      %p106 = scmp.ne.s32.totalorder %s97, %s98
      %p107 = scmp.eq.s32.totalorder %s19, 0
      %p108 = por %p106, %p107
      %p109 = scmp.ne.s32.totalorder %s97, %s98
      %p110 = scmp.eq.s32.totalorder %s20, 1
      %p111 = por %p109, %p110
      %p113 = scmp.ne.s32.totalorder %s98, %s112
      %p114 = scmp.eq.s32.totalorder %s20, 0
      %p115 = por %p113, %p114
      %s116 = ssub.s32 %s14, %s21
      %p117 = scmp.eq.s32.totalorder %s116, 0
      %s119 = sadd.s32 %s118, 1
      %s120 = scalar_select %p117, %s118, %s119
      %p123 = pneg %p117
      %p124 = scmp.eq.s32.totalorder %s14, 1
      %p125 = por %p123, %p124
      %p126 = scmp.ne.s32.totalorder %s118, %s121
      %p127 = scmp.eq.s32.totalorder %s14, 0
      %p128 = por %p126, %p127
      %p129 = scmp.ne.s32.totalorder %s118, %s121
      %p130 = scmp.eq.s32.totalorder %s19, 1
      %p131 = por %p129, %p130
      %p132 = scmp.ne.s32.totalorder %s121, %s122
      %p133 = scmp.eq.s32.totalorder %s19, 0
      %p134 = por %p132, %p133
      %p135 = scmp.ne.s32.totalorder %s121, %s122
      %p136 = scmp.eq.s32.totalorder %s20, 1
      %p137 = por %p135, %p136
      %p139 = scmp.ne.s32.totalorder %s122, %s138
      %p140 = scmp.eq.s32.totalorder %s20, 0
      %p141 = por %p139, %p140
      %p142 = scmp.le.s32.totalorder 1, %s14
      %p143 = scmp.lt.s32.totalorder %s14, 3
      %p144 = pnand %p142, %p143
      %p145 = pneg %p144
      // Predicated region
      $region9: #{tpu_custom_call.1} parent=5 // pred_check
        _
      $region10: #{tpu_custom_call.1} parent=5 // pred_check_branch
        %147 = sbr.rel (%p144) target = $region12
      $region11: #{tpu_custom_call.1} parent=5 // pred_region
        %s148 = ssub.s32 %s14, 1
        // Predicated region
        $region13: #{tpu_custom_call.1} parent=11 // pred_check
          %p149 = pneg %p87
        $region14: #{tpu_custom_call.1} parent=11 // pred_check_branch
          %151 = sbr.rel (%p149) target = $region16
        $region15: #{tpu_custom_call.1} parent=11 // pred_region
          %153 = vsyncadd [#allocation3], 0
          %s154 = sshll.u32 %s2, 4
          %s155 = int_to_ptr.hbm [resolvable:$true] %s154
          %s156 = sshll.u32 [#allocation2], 4
          %s157 = int_to_ptr.vmem [resolvable:$true] %s156
          %162 = dma.hbm_to_vmem [thread:$0]  %s155, 512, %s157, [#allocation3], 64, 64, 4
        $region16: #{tpu_custom_call.1} parent=11 // pred_fallthru
          _
        // Predicated region
        $region17: #{tpu_custom_call.1} parent=11 // pred_check
          %p163 = pneg %p108
        $region18: #{tpu_custom_call.1} parent=11 // pred_check_branch
          %165 = sbr.rel (%p163) target = $region20
        $region19: #{tpu_custom_call.1} parent=11 // pred_region
          _
        $region20: #{tpu_custom_call.1} parent=11 // pred_fallthru
          _
      $region12: #{tpu_custom_call.1} parent=5 // pred_fallthru
        _
      %p166 = scmp.lt.s32.totalorder %s14, 2
      // Predicated region
      $region21: #{tpu_custom_call.1} parent=5 // pred_check
        %p167 = pneg %p166
      $region22: #{tpu_custom_call.1} parent=5 // pred_check_branch
        %169 = sbr.rel (%p167) target = $region24
      $region23: #{tpu_custom_call.1} parent=5 // pred_region
        // Predicated region
        $region25: #{tpu_custom_call.1} parent=23 // pred_check
          %p170 = pneg %p34
        $region26: #{tpu_custom_call.1} parent=23 // pred_check_branch
          %172 = sbr.rel (%p170) target = $region28
        $region27: #{tpu_custom_call.1} parent=23 // pred_region
          %s173 = smul.u32 2, %s14
          %p174 = scmp.lt.s32.totalorder %s173, 3
          %s175 = scalar_select %p174, %s173, 3
          %s176 = smul.addr %s175, 8
          %s177 = scalar_lea.vmem %s0, %s176
          %s178 = smul.u32 2, %s14
        $region28: #{tpu_custom_call.1} parent=23 // pred_fallthru
          _
        // Predicated region
        $region29: #{tpu_custom_call.1} parent=23 // pred_check
          %p179 = pneg %p60
        $region30: #{tpu_custom_call.1} parent=23 // pred_check_branch
          %181 = sbr.rel (%p179) target = $region32
        $region31: #{tpu_custom_call.1} parent=23 // pred_region
          %s182 = smul.u32 2, %s14
          %p183 = scmp.lt.s32.totalorder %s182, 3
          %s184 = scalar_select %p183, %s182, 3
          %s185 = smul.addr %s184, 8
          %s186 = scalar_lea.vmem %s1, %s185
          %s187 = smul.u32 2, %s14
        $region32: #{tpu_custom_call.1} parent=23 // pred_fallthru
          _
      $region24: #{tpu_custom_call.1} parent=5 // pred_fallthru
        _
      %p188 = scmp.le.s32.totalorder 1, %s14
      %p189 = scmp.lt.s32.totalorder %s14, 3
      %p190 = pnand %p188, %p189
      %p191 = pneg %p190
      // Predicated region
      $region33: #{tpu_custom_call.1} parent=5 // pred_check
        _
      $region34: #{tpu_custom_call.1} parent=5 // pred_check_branch
        %193 = sbr.rel (%p190) target = $region36
      $region35: #{tpu_custom_call.1} parent=5 // pred_region
        %s194 = ssub.s32 %s14, 1
        // Predicated region
        $region37: #{tpu_custom_call.1} parent=35 // pred_check
          %p195 = pneg %p87
        $region38: #{tpu_custom_call.1} parent=35 // pred_check_branch
          %197 = sbr.rel (%p195) target = $region40
        $region39: #{tpu_custom_call.1} parent=35 // pred_region
          %199 = dma.done [#allocation3], 512
        $region40: #{tpu_custom_call.1} parent=35 // pred_fallthru
          _
        %s200 = smul.u32 2, %s19
        %p201 = scmp.lt.s32.totalorder %s200, 3
        %s202 = scalar_select %p201, %s200, 3
        %s203 = smul.addr %s202, 8
        %s204 = scalar_lea.vmem %s0, %s203
        %p205 = pneg %p40
        %p206 = pneg %p37
        %s207 = smul.u32 2, %s19
        %p208 = scmp.lt.s32.totalorder %s207, 3
        %s209 = scalar_select %p208, %s207, 3
        %s210 = smul.addr %s209, 8
        %s211 = scalar_lea.vmem %s1, %s210
        %p212 = pneg %p66
        %p213 = pneg %p63
        %p214 = pneg %p87
        %p215 = pneg %p84
        %p216 = pneg %p108
        %p217 = pneg %p105
        %p218 = pneg %p134
        %p219 = pneg %p131
        %s220 = sand.u32 %s121, 1
        %s221 = scalar_lea.sflag [#allocation4], %s220
        %s222 = sand.u32 %s121, 1
        %s223 = smul.addr %s222, 16
        %s224 = scalar_lea.vmem [#allocation5], %s223
        %s225 = smul.u32 2, %s19
        %p226 = scmp.lt.s32.totalorder %s225, 3
        %s227 = scalar_select %p226, %s225, 3
        %s228 = smul.addr %s227, 8
        %s229 = scalar_lea.vmem %s0, %s228
        %s230 = smul.u32 2, %s19
        %s231 = smul.u32 2, %s19
        %p232 = scmp.lt.s32.totalorder %s231, 3
        %s233 = scalar_select %p232, %s231, 3
        %s234 = smul.addr %s233, 8
        %s235 = scalar_lea.vmem %s1, %s234
        %s236 = smul.u32 2, %s19
        %s237 = smul.u32 2, %s19
        %v239 = vld [vmem:[%s229] sm:$0xff]
        %v240 = vld [vmem:[%s229 + $0x8] sm:$0xff]
        %v241 = vpack.c.bf16 %v240, %v239
        %v242 = vld [vmem:[#allocation2] sm:$0xf]
        %v243 = vld [vmem:[#allocation2 + $0x4] sm:$0xf]
        %v244 = vld [vmem:[#allocation2 + $0x8] sm:$0xf]
        %v245 = vld [vmem:[#allocation2 + $0xc] sm:$0xf]
        %v246 = vld [vmem:[#allocation2 + $0x10] sm:$0xf]
        %v247 = vld [vmem:[#allocation2 + $0x14] sm:$0xf]
        %v248 = vld [vmem:[#allocation2 + $0x18] sm:$0xf]
        %v249 = vld [vmem:[#allocation2 + $0x1c] sm:$0xf]
        %v258 = vunpack.c.l.b16 %v242
        %v259 = vunpack.c.l.b16 %v243
        %v260 = vunpack.c.l.b16 %v244
        %v261 = vunpack.c.l.b16 %v245
        %v262 = vunpack.c.l.b16 %v246
        %v263 = vunpack.c.l.b16 %v247
        %v264 = vunpack.c.l.b16 %v248
        %v265 = vunpack.c.l.b16 %v249
        %v266 = vpack.c.b16 %v259, %v258
        %v267 = vpack.c.b16 %v261, %v260
        %v268 = vpack.c.b16 %v263, %v262
        %v269 = vpack.c.b16 %v265, %v264
        %vm274 = vcmask 523264
        %v276 = vsel %vm274, %v241, 0
        %278 = vmatpush.bf16.msra.mxu0 0
        %279 = vmatpush.bf16.msra.mxu0 0
        %280 = vmatpush.bf16.msra.mxu0 0
        %281 = vmatpush.bf16.msra.mxu0 0
        %282 = vmatpush.bf16.msra.mxu0 %v269
        %283 = vmatpush.bf16.msra.mxu0 %v268
        %284 = vmatpush.bf16.msra.mxu0 %v267
        %285 = vmatpush.bf16.msra.mxu0 %v266
        %286 = vmatmul.bf16.gmra.mxu0 %v276
        %v287 = vpop.f32.mrf.mxu0
        %v288 = vadd.f32 0.0, %v287
        %v289 = vpop.f32.mrf.mxu0
        %v290 = vadd.f32 0.0, %v289
        %291 = vdwg.mxu0
        %v292 = vld [vmem:[%s235] sm:$0xff]
        %v293 = vld [vmem:[%s235 + $0x8] sm:$0xff]
        %vm294 = vcmp.gt.f32.partialorder %v292, 0.0
        %vm295 = vcmp.gt.f32.partialorder %v293, 0.0
        %v296 = vsel %vm294, 1, 0
        %v297 = vsel %vm295, 1, 0
        %298 = vset.pattern.permute.xlu0 0
        %299 = vperm.xlu0 %298, %v296
        %v300 = vpop.permute.xlu0 %299
        %301 = vset.pattern.permute.xlu0 0
        %302 = vperm.xlu0 %301, %v297
        %v303 = vpop.permute.xlu0 %302
        %vm304 = vcmp.eq.s32.totalorder %v300, 1
        %vm305 = vcmp.eq.s32.totalorder %v303, 1
        %v306 = vsel %vm304, %v288, 0.0
        %v307 = vsel %vm305, %v290, 0.0
        %v308 = vld [vmem:[%s3] sm:$0x1]
        %v310 = vperm.slane %v308, 0
        %v312 = vadd.f32 %v306, %v310
        %v313 = vadd.f32 %v307, %v310
        %314 = vst [vmem:[%s224] sm:$0xff] %v312
        %315 = vst [vmem:[%s224 + $0x8] sm:$0xff] %v313
        %s316 = sand.u32 %s121, 1
        %s317 = scalar_lea.sflag [#allocation4], %s316
        %s318 = sand.u32 %s121, 1
        %s319 = smul.addr %s318, 16
        %s320 = scalar_lea.vmem [#allocation5], %s319
        // Predicated region
        $region41: #{tpu_custom_call.1} parent=35 // pred_check
          %p321 = pneg %p131
        $region42: #{tpu_custom_call.1} parent=35 // pred_check_branch
          %323 = sbr.rel (%p321) target = $region44
        $region43: #{tpu_custom_call.1} parent=35 // pred_region
          %s324 = smul.u32 2, %s19
          %326 = vsyncadd %s317, 0
          %s327 = smul.addr %s324, 8
          %s328 = scalar_lea.hbm %s4, %s327
          %s329 = sshll.u32 %s320, 4
          %s330 = int_to_ptr.vmem [resolvable:$true] %s329
          %s331 = sshll.u32 %s328, 4
          %s332 = int_to_ptr.hbm [resolvable:$true] %s331
          %337 = dma.vmem_to_hbm [thread:$0]  %s330, 256, %s332, %s317, 128, 128, 8
        $region44: #{tpu_custom_call.1} parent=35 // pred_fallthru
          _
      $region36: #{tpu_custom_call.1} parent=5 // pred_fallthru
        _
      %p338 = scmp.le.s32.totalorder 2, %s14
      // Predicated region
      $region45: #{tpu_custom_call.1} parent=5 // pred_check
        %p339 = pneg %p338
      $region46: #{tpu_custom_call.1} parent=5 // pred_check_branch
        %341 = sbr.rel (%p339) target = $region48
      $region47: #{tpu_custom_call.1} parent=5 // pred_region
        %s342 = ssub.s32 %s14, 2
        // Predicated region
        $region49: #{tpu_custom_call.1} parent=47 // pred_check
          %p343 = pneg %p137
        $region50: #{tpu_custom_call.1} parent=47 // pred_check_branch
          %345 = sbr.rel (%p343) target = $region52
        $region51: #{tpu_custom_call.1} parent=47 // pred_region
          %s346 = sand.u32 %s122, 1
          %s347 = scalar_lea.sflag [#allocation4], %s346
          %s348 = sand.u32 %s122, 1
          %s349 = smul.addr %s348, 16
          %s350 = scalar_lea.vmem [#allocation5], %s349
          %352 = dma.done %s347, 256
        $region52: #{tpu_custom_call.1} parent=47 // pred_fallthru
          _
      $region48: #{tpu_custom_call.1} parent=5 // pred_fallthru
        _
    $region6: #{tpu_custom_call.1} parent=1 // loop_footer
      %s18 = sadd.s32 1, %s14
    $region7: #{tpu_custom_call.1} parent=1 // loop_footer_branch
      %13 = sbr.rel target = $region3
    $region8: #{tpu_custom_call.1} parent=1 // loop_exit
      _
    %353 = vsyncpa [#allocation3], 1
    %s354 = scalar_lea.sflag [#allocation3], 1
    %355 = vsyncpa %s354, 1
    %356 = vsyncpa [#allocation4], 1
    %s357 = scalar_lea.sflag [#allocation4], 1
    %358 = vsyncpa %s357, 1

</llo_original>
